<compile_context>
chip_gen: v5e
topology: v5e:2x2
jax: 0.10.0
libtpu: 0.0.40
codegen_flags: <defaults>
</compile_context>

<pallas_src>
import math
from functools import partial

import jax
import jax.numpy as jnp
import numpy as np
from jax import lax
from jax.experimental import pallas as pl
from jax.experimental.pallas import tpu as pltpu

EPSILON = 0.001
LANE = 128           # vreg lane width: each gate group padded to a multiple
SUBLANE_BF16 = 16    # bf16 sublane packing; keep the batch a multiple of this


def _round_up(x, m):
    return ((x + m - 1) // m) * m


def _pick_time_chunk(T, target):
    # Largest divisor of T that is <= target (keeps the grid exact, no masking).
    for d in range(min(target, T), 0, -1):
        if T % d == 0:
            return d
    return T


# ----------------------------------------------------------------------------
# Pallas kernel: power-law recurrence over one time chunk; carry in VMEM scratch.
# ----------------------------------------------------------------------------
def powerlaw_recurrence_kernel(
    xb_ref,        # (Tt, Bp, 3*HP) bf16  precomputed x @ W_ih.T + bias (chunk)
    whh_ref,       # (HP, 3*HP)     bf16  fused hidden->gates weights (W_hh.T)
    p_ref,         # (1, HP)        f32   fixed power-law exponent (learn_p=False)
    hs_ref,        # out (Tt, Bp, HP) bf16 hidden state per step (chunk)
    h_out_ref,     # out (Bp, HP) f32 final h
    c_out_ref,     # out (Bp, HP) f32 final c
    k_out_ref,     # out (Bp, HP) f32 final k
    h_scr,         # scratch (Bp, HP) f32 — carry across time chunks
    c_scr,         # scratch (Bp, HP) f32
    k_scr,         # scratch (Bp, HP) f32
):
    chunk = pl.program_id(0)
    n_chunks = pl.num_programs(0)
    Tt, Bp, _ = xb_ref.shape
    HP = whh_ref.shape[0]

    # Initial hidden state (PowerLawLayerJIT with hidden=None): h=0, c=0, k=-1.
    @pl.when(chunk == 0)
    def _init():
        h_scr[...] = jnp.zeros((Bp, HP), jnp.float32)
        c_scr[...] = jnp.zeros((Bp, HP), jnp.float32)
        k_scr[...] = jnp.full((Bp, HP), -1.0, jnp.float32)

    whh = whh_ref[...]          # hoisted: weights stay in vregs across the loop
    p_t = p_ref[...]            # (1, HP) broadcasts over batch
    t0 = (chunk * Tt).astype(jnp.float32)

    def step(i, carry):
        h, c, k = carry
        xb = xb_ref[i].astype(jnp.float32)                  # (Bp, 3*HP)

        # Single fused MXU push per step (bf16 inputs, f32 accumulation).
        gates = xb + jnp.dot(h.astype(jnp.bfloat16), whh,
                             preferred_element_type=jnp.float32)

        # One sigmoid over the combined r/out slab; slices are lane-aligned.
        ro = jax.nn.sigmoid(gates[:, 0:2 * HP])
        rgate = ro[:, 0:HP]
        outgate = ro[:, HP:2 * HP]
        cellgate = jnp.tanh(gates[:, 2 * HP:3 * HP])

        tf = t0 + i.astype(jnp.float32)
        k_new = rgate * (tf - EPSILON) + (1.0 - rgate) * k
        num = tf - k_new + EPSILON
        den = tf - k_new + 1.0
        ratio = num / den                       # in (0, 1]; > 0 by the k-invariant
        forgetgate = jnp.exp(p_t * jnp.log(ratio))           # ratio ** p
        c_new = forgetgate * c + (1.0 - forgetgate) * cellgate
        h_new = outgate * jnp.tanh(c_new)

        hs_ref[i] = h_new.astype(hs_ref.dtype)               # lane-dense store
        return (h_new, c_new, k_new)

    h_f, c_f, k_f = lax.fori_loop(
        0, Tt, step, (h_scr[...], c_scr[...], k_scr[...]))

    # Persist the carry for the next chunk.
    h_scr[...] = h_f
    c_scr[...] = c_f
    k_scr[...] = k_f

    @pl.when(chunk == n_chunks - 1)
    def _finalize():
        h_out_ref[...] = h_f
        c_out_ref[...] = c_f
        k_out_ref[...] = k_f


# ----------------------------------------------------------------------------
# Parameter construction (deterministic, mirrors PowerLawCell / nn.Linear init)
# ----------------------------------------------------------------------------
def init_params(key, input_size, hidden_size, output_size, p=0.2):
    H, I, O = hidden_size, input_size, output_size
    stdv = 1.0 / math.sqrt(H)
    k1, k2, k3, k4, k5 = jax.random.split(key, 5)
    weight_ih = jax.random.uniform(k1, (3 * H, I), jnp.float32, -stdv, stdv)
    weight_hh = jax.random.uniform(k2, (3 * H, H), jnp.float32, -stdv, stdv)
    bias = jax.random.uniform(k3, (3 * H,), jnp.float32, -stdv, stdv)
    lin_w = jax.random.uniform(k4, (O, H), jnp.float32, -stdv, stdv)   # nn.Linear
    lin_b = jax.random.uniform(k5, (O,), jnp.float32, -stdv, stdv)

    return dict(
        w_ih=weight_ih,                        # (3H, I) torch layout; gate order
        w_hh=weight_hh,                        # (3H, H) is r, out, cell (chunk(3,1))
        bias=bias,                             # (3H,)
        p=jnp.full((1, H), p, jnp.float32),    # learn_p=False: used as-is
        wout=lin_w.T,                          # (H, O)
        bout=lin_b.reshape(1, O),              # (1, O)
    )


def _pad_gate_columns(w, H, HP):
    """Pad each of the 3 gate column groups of a (..., 3H) array to HP lanes."""
    if HP == H:
        return w
    lead = w.shape[:-1]
    w3 = w.reshape(lead + (3, H))
    w3 = jnp.pad(w3, [(0, 0)] * len(lead) + [(0, 0), (0, HP - H)])
    return w3.reshape(lead + (3 * HP,))


# ----------------------------------------------------------------------------
# Wrapper: hoisted one-hot input projection, time-chunked pallas_call
# recurrence, hoisted output Linear + log_softmax, transpose to batch-first.
# ----------------------------------------------------------------------------
@partial(jax.jit, static_argnames=("time_chunk",))
def powerlaw_lstm_forward(tokens, params, *, time_chunk=64):
    B, T = tokens.shape
    H = params["w_hh"].shape[1]
    HP = _round_up(H, LANE)                       # lane-aligned per-gate width
    Bp = _round_up(max(B, SUBLANE_BF16), SUBLANE_BF16)
    Tt = _pick_time_chunk(T, time_chunk)
    n_chunks = T // Tt

    # Gate-lane-padded parameters (zero columns/rows -> padded lanes are inert).
    w_ih_p = _pad_gate_columns(params["w_ih"].T, H, HP)             # (I, 3HP)
    bias_p = _pad_gate_columns(params["bias"], H, HP)               # (3HP,)
    w_hh_p = _pad_gate_columns(params["w_hh"].T, H, HP)             # (H, 3HP)
    w_hh_p = jnp.pad(w_hh_p, ((0, HP - H), (0, 0))).astype(jnp.bfloat16)
    p_p = jnp.pad(params["p"], ((0, 0), (0, HP - H)))               # (1, HP) f32

    # nn.Embedding.from_pretrained(torch.eye(I)) is a one-hot; one-hot @ W_ih.T
    # is a row gather of W_ih.T.  Build it directly time-major, bias folded in,
    # and stored in bf16 (halves the dominant HBM->VMEM traffic).
    xb = (jnp.take(w_ih_p, tokens.T, axis=0) + bias_p).astype(jnp.bfloat16)
    if Bp != B:                                                     # (T, Bp, 3HP)
        xb = jnp.pad(xb, ((0, 0), (0, Bp - B), (0, 0)))

    # VMEM budget: 2 buffers per streamed block + resident weights/state.
    vmem_bytes = (
        2 * Tt * Bp * 3 * HP * 2       # xb (bf16, double-buffered)
        + 2 * Tt * Bp * HP * 2         # hs (bf16, double-buffered)
        + HP * 3 * HP * 2 + HP * 4     # w_hh (bf16) + p (f32)
        + 3 * 2 * Bp * HP * 4          # h/c/k outputs
        + 3 * Bp * HP * 4              # h/c/k scratch
    )
    vmem_limit = min(100 << 20, max(16 << 20, 2 * vmem_bytes))

    hs, h_f, c_f, k_f = pl.pallas_call(
        powerlaw_recurrence_kernel,
        out_shape=[
            jax.ShapeDtypeStruct((T, Bp, HP), jnp.bfloat16),
            jax.ShapeDtypeStruct((Bp, HP), jnp.float32),
            jax.ShapeDtypeStruct((Bp, HP), jnp.float32),
            jax.ShapeDtypeStruct((Bp, HP), jnp.float32),
        ],
        grid_spec=pltpu.PrefetchScalarGridSpec(
            num_scalar_prefetch=0,
            grid=(n_chunks,),                          # serial time-chunk loop
            in_specs=[
                pl.BlockSpec((Tt, Bp, 3 * HP), lambda t: (t, 0, 0)),
                pl.BlockSpec((HP, 3 * HP), lambda t: (0, 0)),
                pl.BlockSpec((1, HP), lambda t: (0, 0)),
            ],
            out_specs=[
                pl.BlockSpec((Tt, Bp, HP), lambda t: (t, 0, 0)),
                pl.BlockSpec((Bp, HP), lambda t: (0, 0)),
                pl.BlockSpec((Bp, HP), lambda t: (0, 0)),
                pl.BlockSpec((Bp, HP), lambda t: (0, 0)),
            ],
            scratch_shapes=[
                pltpu.VMEM((Bp, HP), jnp.float32),     # h carry
                pltpu.VMEM((Bp, HP), jnp.float32),     # c carry
                pltpu.VMEM((Bp, HP), jnp.float32),     # k carry
            ],
        ),
        compiler_params=pltpu.CompilerParams(
            dimension_semantics=("arbitrary",),
            vmem_limit_bytes=vmem_limit,
        ),
    )(xb, w_hh_p, p_p)

    # Drop batch / lane padding before the output head.
    hs = hs[:, :B, :H].astype(jnp.float32)                          # (T, B, H)

    # Output Linear + log_softmax hoisted out of the serial loop: one batched
    # lane-dense matmul instead of T tiny K=H, N=O matmuls.
    logits = jnp.einsum("tbh,ho->tbo", hs, params["wout"],
                        preferred_element_type=jnp.float32) + params["bout"]
    log_probs = jax.nn.log_softmax(logits, axis=-1)
    log_probs = jnp.transpose(log_probs, (1, 0, 2))                  # (B, T, O)

    return log_probs, (h_f[:B, :H], c_f[:B, :H], k_f[:B, :H])


# ----------------------------------------------------------------------------
# Pure-JAX f32 reference of the same forward (sanity check).
# ----------------------------------------------------------------------------
def powerlaw_lstm_reference(tokens, params):
    B, T = tokens.shape
    I = params["w_ih"].shape[1]
    H = params["w_hh"].shape[1]
    e = jnp.eye(I, dtype=jnp.float32)[tokens]              # (B, T, I)
    w_ih_t = params["w_ih"].T
    w_hh_t = params["w_hh"].T
    bias = params["bias"]
    h = jnp.zeros((B, H), jnp.float32)
    c = jnp.zeros((B, H), jnp.float32)
    k = jnp.zeros((B, H), jnp.float32) - 1.0
    outs = []
    for t in range(T):
        x = e[:, t, :]
        gates = x @ w_ih_t + h @ w_hh_t + bias
        rgate = jax.nn.sigmoid(gates[:, 0:H])
        outgate = jax.nn.sigmoid(gates[:, H:2 * H])
        cellgate = jnp.tanh(gates[:, 2 * H:])
        tf = float(t)
        k = rgate * (tf - EPSILON) + (1 - rgate) * k
        forget = jnp.power((tf - k + EPSILON) / (tf - k + 1.0), params["p"])
        c = forget * c + (1 - forget) * cellgate
        h = outgate * jnp.tanh(c)
        outs.append(h)
    hs = jnp.stack(outs, axis=1)                           # (B, T, H)
    logits = hs @ params["wout"] + params["bout"][0]
    return jax.nn.log_softmax(logits, axis=2), (h, c, k)


if __name__ == "__main__":
    B, T = 2, 8
    INPUT_SIZE, HIDDEN_SIZE, OUTPUT_SIZE = 10, 32, 10

    key = jax.random.PRNGKey(0)
    kp, kt = jax.random.split(key)
    params = init_params(kp, INPUT_SIZE, HIDDEN_SIZE, OUTPUT_SIZE, p=0.2)
    tokens = jax.random.randint(kt, (B, T), 0, INPUT_SIZE, dtype=jnp.int32)

    # time_chunk=4 -> grid=(2,) so the scratch-resident carry across grid steps
    # is exercised even at this toy T (production default is 64).
    log_probs, (h_f, c_f, k_f) = jax.block_until_ready(
        powerlaw_lstm_forward(tokens, params, time_chunk=4))

    ref_logp, (h_r, c_r, k_r) = powerlaw_lstm_reference(tokens, params)

    assert log_probs.shape == (B, T, OUTPUT_SIZE)
    assert bool(jnp.all(jnp.isfinite(log_probs)))
    # bf16 xb/hs storage + bf16 MXU inputs are the only numerics delta vs. the
    # f32 reference (ratio division is exact); observed drift is well below 2e-2.
    np.testing.assert_allclose(np.asarray(log_probs), np.asarray(ref_logp),
                               rtol=2e-2, atol=2e-2)
    np.testing.assert_allclose(np.asarray(h_f), np.asarray(h_r), rtol=2e-2, atol=2e-2)
    np.testing.assert_allclose(np.asarray(c_f), np.asarray(c_r), rtol=2e-2, atol=2e-2)
    np.testing.assert_allclose(np.asarray(k_f), np.asarray(k_r), rtol=2e-2, atol=2e-2)

    print("KERNEL_OK")
</pallas_src>

<mosaic_0001>
module attributes {stable_mosaic.version = 11 : i64} {
  func.func @powerlaw_recurrence_kernel(%arg0: i32, %arg1: memref<4x16x384xbf16, #tpu.memory_space<vmem>>, %arg2: memref<128x384xbf16, #tpu.memory_space<vmem>>, %arg3: memref<1x128xf32, #tpu.memory_space<vmem>>, %arg4: memref<4x16x128xbf16, #tpu.memory_space<vmem>>, %arg5: memref<16x128xf32, #tpu.memory_space<vmem>>, %arg6: memref<16x128xf32, #tpu.memory_space<vmem>>, %arg7: memref<16x128xf32, #tpu.memory_space<vmem>>, %arg8: memref<16x128xf32, #tpu.memory_space<vmem>>, %arg9: memref<16x128xf32, #tpu.memory_space<vmem>>, %arg10: memref<16x128xf32, #tpu.memory_space<vmem>>) attributes {dimension_semantics = [#tpu.dimension_semantics<arbitrary>], iteration_bounds = array<i64: 2>, scalar_prefetch = 0 : i64, scratch_operands = 3 : i64, tpu.core_type = #tpu.core_type<tc>, window_params = [{transform_indices = @transform_0, window_bounds = array<i64: 4, 16, 384>}, {pipeline_mode = #tpu.pipeline_mode<synchronous>, transform_indices = @transform_1, window_bounds = array<i64: 128, 384>}, {pipeline_mode = #tpu.pipeline_mode<synchronous>, transform_indices = @transform_2, window_bounds = array<i64: 1, 128>}, {transform_indices = @transform_3, window_bounds = array<i64: 4, 16, 128>}, {pipeline_mode = #tpu.pipeline_mode<synchronous>, transform_indices = @transform_4, window_bounds = array<i64: 16, 128>}, {pipeline_mode = #tpu.pipeline_mode<synchronous>, transform_indices = @transform_5, window_bounds = array<i64: 16, 128>}, {pipeline_mode = #tpu.pipeline_mode<synchronous>, transform_indices = @transform_6, window_bounds = array<i64: 16, 128>}]} {
    %c0_i32 = arith.constant 0 : i32
    %0 = arith.cmpi eq, %arg0, %c0_i32 : i32
    %1 = arith.extui %0 : i1 to i32
    %c0_i32_0 = arith.constant 0 : i32
    %2 = arith.cmpi ne, %1, %c0_i32_0 : i32
    scf.if %2 {
      %cst = arith.constant 0.000000e+00 : f32
      %18 = vector.broadcast %cst : f32 to vector<16x128xf32>
      %c0_21 = arith.constant 0 : index
      %c0_22 = arith.constant 0 : index
      %19 = vector.load %arg8[%c0_21, %c0_22] : memref<16x128xf32, #tpu.memory_space<vmem>>, vector<16x128xf32>
      tpu.vector_store %arg8[%c0_21, %c0_22], %18 {strides = array<i32>} : memref<16x128xf32, #tpu.memory_space<vmem>>, vector<16x128xf32>,
      %cst_23 = arith.constant 0.000000e+00 : f32
      %20 = vector.broadcast %cst_23 : f32 to vector<16x128xf32>
      %c0_24 = arith.constant 0 : index
      %c0_25 = arith.constant 0 : index
      %21 = vector.load %arg9[%c0_24, %c0_25] : memref<16x128xf32, #tpu.memory_space<vmem>>, vector<16x128xf32>
      tpu.vector_store %arg9[%c0_24, %c0_25], %20 {strides = array<i32>} : memref<16x128xf32, #tpu.memory_space<vmem>>, vector<16x128xf32>,
      %cst_26 = arith.constant -1.000000e+00 : f32
      %22 = vector.broadcast %cst_26 : f32 to vector<16x128xf32>
      %c0_27 = arith.constant 0 : index
      %c0_28 = arith.constant 0 : index
      %23 = vector.load %arg10[%c0_27, %c0_28] : memref<16x128xf32, #tpu.memory_space<vmem>>, vector<16x128xf32>
      tpu.vector_store %arg10[%c0_27, %c0_28], %22 {strides = array<i32>} : memref<16x128xf32, #tpu.memory_space<vmem>>, vector<16x128xf32>,
    } else {
    }
    %c0 = arith.constant 0 : index
    %c0_1 = arith.constant 0 : index
    %3 = vector.load %arg2[%c0, %c0_1] : memref<128x384xbf16, #tpu.memory_space<vmem>>, vector<128x384xbf16>
    %c0_2 = arith.constant 0 : index
    %c0_3 = arith.constant 0 : index
    %4 = vector.load %arg3[%c0_2, %c0_3] : memref<1x128xf32, #tpu.memory_space<vmem>>, vector<1x128xf32>
    %c4_i32 = arith.constant 4 : i32
    %5 = arith.muli %arg0, %c4_i32 : i32
    %6 = arith.sitofp %5 : i32 to f32
    %c0_4 = arith.constant 0 : index
    %c0_5 = arith.constant 0 : index
    %7 = vector.load %arg8[%c0_4, %c0_5] : memref<16x128xf32, #tpu.memory_space<vmem>>, vector<16x128xf32>
    %c0_6 = arith.constant 0 : index
    %c0_7 = arith.constant 0 : index
    %8 = vector.load %arg9[%c0_6, %c0_7] : memref<16x128xf32, #tpu.memory_space<vmem>>, vector<16x128xf32>
    %c0_8 = arith.constant 0 : index
    %c0_9 = arith.constant 0 : index
    %9 = vector.load %arg10[%c0_8, %c0_9] : memref<16x128xf32, #tpu.memory_space<vmem>>, vector<16x128xf32>
    %c0_i32_10 = arith.constant 0 : i32
    %c4_i32_11 = arith.constant 4 : i32
    %10 = arith.addi %c0_i32_10, %c4_i32_11 : i32
    %c1_i32 = arith.constant 1 : i32
    %11:3 = scf.for %arg11 = %c0_i32_10 to %10 step %c1_i32 iter_args(%arg12 = %7, %arg13 = %8, %arg14 = %9) -> (vector<16x128xf32>, vector<16x128xf32>, vector<16x128xf32>)  : i32 {
      %18 = arith.index_cast %arg11 : i32 to index
      %c0_21 = arith.constant 0 : index
      %c0_22 = arith.constant 0 : index
      %19 = vector.load %arg1[%18, %c0_21, %c0_22] : memref<4x16x384xbf16, #tpu.memory_space<vmem>>, vector<1x16x384xbf16>
      %20 = vector.shape_cast %19 : vector<1x16x384xbf16> to vector<16x384xbf16>
      %21 = arith.extf %20 : vector<16x384xbf16> to vector<16x384xf32>
      %22 = arith.truncf %arg12 : vector<16x128xf32> to vector<16x128xbf16>
      %cst = arith.constant dense<0.000000e+00> : vector<16x384xf32>
      %23 = tpu.matmul %22, %3, %cst {dimension_numbers = #tpu.dot_dimension_numbers<[1], [0], [0], [1], [0, 0, 1, 1], [], []>} : vector<16x128xbf16>, vector<128x384xbf16>, vector<16x384xf32> -> vector<16x384xf32>
      %24 = arith.addf %21, %23 : vector<16x384xf32>
      %25 = vector.extract_strided_slice %24 {offsets = [0, 0], sizes = [16, 256], strides = [1, 1]} : vector<16x384xf32> to vector<16x256xf32>
      %26 = arith.negf %25 : vector<16x256xf32>
      %27 = math.exp %26 : vector<16x256xf32>
      %cst_23 = arith.constant 1.000000e+00 : f32
      %28 = vector.broadcast %cst_23 : f32 to vector<16x256xf32>
      %29 = arith.addf %28, %27 : vector<16x256xf32>
      %30 = arith.divf %28, %29 : vector<16x256xf32>
      %31 = vector.extract_strided_slice %30 {offsets = [0, 0], sizes = [16, 128], strides = [1, 1]} : vector<16x256xf32> to vector<16x128xf32>
      %32 = vector.extract_strided_slice %30 {offsets = [0, 128], sizes = [16, 128], strides = [1, 1]} : vector<16x256xf32> to vector<16x128xf32>
      %33 = vector.extract_strided_slice %24 {offsets = [0, 256], sizes = [16, 128], strides = [1, 1]} : vector<16x384xf32> to vector<16x128xf32>
      %34 = math.tanh %33 : vector<16x128xf32>
      %35 = arith.sitofp %arg11 : i32 to f32
      %36 = arith.addf %6, %35 : f32
      %cst_24 = arith.constant 1.000000e-03 : f32
      %37 = arith.subf %36, %cst_24 : f32
      %38 = vector.broadcast %37 : f32 to vector<16x128xf32>
      %39 = arith.mulf %31, %38 : vector<16x128xf32>
      %cst_25 = arith.constant 1.000000e+00 : f32
      %40 = vector.broadcast %cst_25 : f32 to vector<16x128xf32>
      %41 = arith.subf %40, %31 : vector<16x128xf32>
      %42 = arith.mulf %41, %arg14 : vector<16x128xf32>
      %43 = arith.addf %39, %42 : vector<16x128xf32>
      %44 = vector.broadcast %36 : f32 to vector<16x128xf32>
      %45 = arith.subf %44, %43 : vector<16x128xf32>
      %cst_26 = arith.constant 1.000000e-03 : f32
      %46 = vector.broadcast %cst_26 : f32 to vector<16x128xf32>
      %47 = arith.addf %45, %46 : vector<16x128xf32>
      %48 = vector.broadcast %36 : f32 to vector<16x128xf32>
      %49 = arith.subf %48, %43 : vector<16x128xf32>
      %cst_27 = arith.constant 1.000000e+00 : f32
      %50 = vector.broadcast %cst_27 : f32 to vector<16x128xf32>
      %51 = arith.addf %49, %50 : vector<16x128xf32>
      %52 = arith.divf %47, %51 : vector<16x128xf32>
      %53 = math.log %52 : vector<16x128xf32>
      %54 = vector.broadcast %4 : vector<1x128xf32> to vector<16x128xf32>
      %55 = arith.mulf %54, %53 : vector<16x128xf32>
      %56 = math.exp %55 : vector<16x128xf32>
      %57 = arith.mulf %56, %arg13 : vector<16x128xf32>
      %cst_28 = arith.constant 1.000000e+00 : f32
      %58 = vector.broadcast %cst_28 : f32 to vector<16x128xf32>
      %59 = arith.subf %58, %56 : vector<16x128xf32>
      %60 = arith.mulf %59, %34 : vector<16x128xf32>
      %61 = arith.addf %57, %60 : vector<16x128xf32>
      %62 = math.tanh %61 : vector<16x128xf32>
      %63 = arith.mulf %32, %62 : vector<16x128xf32>
      %64 = arith.truncf %63 : vector<16x128xf32> to vector<16x128xbf16>
      %65 = arith.index_cast %arg11 : i32 to index
      %c0_29 = arith.constant 0 : index
      %c0_30 = arith.constant 0 : index
      %66 = vector.load %arg4[%65, %c0_29, %c0_30] : memref<4x16x128xbf16, #tpu.memory_space<vmem>>, vector<1x16x128xbf16>
      %67 = vector.shape_cast %66 : vector<1x16x128xbf16> to vector<16x128xbf16>
      %68 = vector.shape_cast %64 : vector<16x128xbf16> to vector<1x16x128xbf16>
      tpu.vector_store %arg4[%65, %c0_29, %c0_30], %68 {strides = array<i32>} : memref<4x16x128xbf16, #tpu.memory_space<vmem>>, vector<1x16x128xbf16>,
      scf.yield %63, %61, %43 : vector<16x128xf32>, vector<16x128xf32>, vector<16x128xf32>
    }
    %c4_i32_12 = arith.constant 4 : i32
    %c0_13 = arith.constant 0 : index
    %c0_14 = arith.constant 0 : index
    %12 = vector.load %arg8[%c0_13, %c0_14] : memref<16x128xf32, #tpu.memory_space<vmem>>, vector<16x128xf32>
    tpu.vector_store %arg8[%c0_13, %c0_14], %11#0 {strides = array<i32>} : memref<16x128xf32, #tpu.memory_space<vmem>>, vector<16x128xf32>,
    %c0_15 = arith.constant 0 : index
    %c0_16 = arith.constant 0 : index
    %13 = vector.load %arg9[%c0_15, %c0_16] : memref<16x128xf32, #tpu.memory_space<vmem>>, vector<16x128xf32>
    tpu.vector_store %arg9[%c0_15, %c0_16], %11#1 {strides = array<i32>} : memref<16x128xf32, #tpu.memory_space<vmem>>, vector<16x128xf32>,
    %c0_17 = arith.constant 0 : index
    %c0_18 = arith.constant 0 : index
    %14 = vector.load %arg10[%c0_17, %c0_18] : memref<16x128xf32, #tpu.memory_space<vmem>>, vector<16x128xf32>
    tpu.vector_store %arg10[%c0_17, %c0_18], %11#2 {strides = array<i32>} : memref<16x128xf32, #tpu.memory_space<vmem>>, vector<16x128xf32>,
    %c1_i32_19 = arith.constant 1 : i32
    %15 = arith.cmpi eq, %arg0, %c1_i32_19 : i32
    %16 = arith.extui %15 : i1 to i32
    %c0_i32_20 = arith.constant 0 : i32
    %17 = arith.cmpi ne, %16, %c0_i32_20 : i32
    scf.if %17 {
      %c0_21 = arith.constant 0 : index
      %c0_22 = arith.constant 0 : index
      %18 = vector.load %arg5[%c0_21, %c0_22] : memref<16x128xf32, #tpu.memory_space<vmem>>, vector<16x128xf32>
      tpu.vector_store %arg5[%c0_21, %c0_22], %11#0 {strides = array<i32>} : memref<16x128xf32, #tpu.memory_space<vmem>>, vector<16x128xf32>,
      %c0_23 = arith.constant 0 : index
      %c0_24 = arith.constant 0 : index
      %19 = vector.load %arg6[%c0_23, %c0_24] : memref<16x128xf32, #tpu.memory_space<vmem>>, vector<16x128xf32>
      tpu.vector_store %arg6[%c0_23, %c0_24], %11#1 {strides = array<i32>} : memref<16x128xf32, #tpu.memory_space<vmem>>, vector<16x128xf32>,
      %c0_25 = arith.constant 0 : index
      %c0_26 = arith.constant 0 : index
      %20 = vector.load %arg7[%c0_25, %c0_26] : memref<16x128xf32, #tpu.memory_space<vmem>>, vector<16x128xf32>
      tpu.vector_store %arg7[%c0_25, %c0_26], %11#2 {strides = array<i32>} : memref<16x128xf32, #tpu.memory_space<vmem>>, vector<16x128xf32>,
    } else {
    }
    return
  }
  func.func @transform_0(%arg0: i32) -> (i32, i32, i32) {
    %c0_i32 = arith.constant 0 : i32
    %c0_i32_0 = arith.constant 0 : i32
    %c0_i32_1 = arith.constant 0 : i32
    return %arg0, %c0_i32, %c0_i32_0 : i32, i32, i32
  }
  func.func @transform_1(%arg0: i32) -> (i32, i32) {
    %c0_i32 = arith.constant 0 : i32
    %c0_i32_0 = arith.constant 0 : i32
    %c0_i32_1 = arith.constant 0 : i32
    return %c0_i32, %c0_i32_0 : i32, i32
  }
  func.func @transform_2(%arg0: i32) -> (i32, i32) {
    %c0_i32 = arith.constant 0 : i32
    %c0_i32_0 = arith.constant 0 : i32
    %c0_i32_1 = arith.constant 0 : i32
    return %c0_i32, %c0_i32_0 : i32, i32
  }
  func.func @transform_3(%arg0: i32) -> (i32, i32, i32) {
    %c0_i32 = arith.constant 0 : i32
    %c0_i32_0 = arith.constant 0 : i32
    %c0_i32_1 = arith.constant 0 : i32
    return %arg0, %c0_i32, %c0_i32_0 : i32, i32, i32
  }
  func.func @transform_4(%arg0: i32) -> (i32, i32) {
    %c0_i32 = arith.constant 0 : i32
    %c0_i32_0 = arith.constant 0 : i32
    %c0_i32_1 = arith.constant 0 : i32
    return %c0_i32, %c0_i32_0 : i32, i32
  }
  func.func @transform_5(%arg0: i32) -> (i32, i32) {
    %c0_i32 = arith.constant 0 : i32
    %c0_i32_0 = arith.constant 0 : i32
    %c0_i32_1 = arith.constant 0 : i32
    return %c0_i32, %c0_i32_0 : i32, i32
  }
  func.func @transform_6(%arg0: i32) -> (i32, i32) {
    %c0_i32 = arith.constant 0 : i32
    %c0_i32_0 = arith.constant 0 : i32
    %c0_i32_1 = arith.constant 0 : i32
    return %c0_i32, %c0_i32_0 : i32, i32
  }
}

</mosaic_0001>

<llo_original>
// kernel: powerlaw_lstm_forward.1
$region0: #{powerlaw_lstm_forward.1}
  #allocation0 [shape = 'u32[]', space=smem, size = 0x4, offset = 0x4, fixed_abs, tag = 'smem constant byte address 0x4 - core index']
  #allocation1 [shape = 'u32[72,128]{1,0:T(1,128)}', space=vmem, size = 0x9000, scoped, tag = 'internal scratch']
  #allocation2 [shape = 'f32[16,128]{1,0:T(8,128)}', space=vmem, size = 0x2000, scoped, tag = 'scratch operand']
  #allocation3 [shape = 'f32[16,128]{1,0:T(8,128)}', space=vmem, size = 0x2000, scoped, tag = 'scratch operand']
  #allocation4 [shape = 'f32[16,128]{1,0:T(8,128)}', space=vmem, size = 0x2000, scoped, tag = 'scratch operand']
  %s0 = inlined_call_operand.vmem [shape: bf16[8,16,384], index: 0, kind: input, shape index: {}]
  %s1 = inlined_call_operand.vmem [shape: bf16[128,384], index: 1, kind: input, shape index: {}]
  %s2 = inlined_call_operand.vmem [shape: f32[1,128], index: 2, kind: input, shape index: {}]
  %s3 = inlined_call_operand.vmem [shape: bf16[8,16,128], index: 3, kind: output, shape index: {0}]
  %s4 = inlined_call_operand.vmem [shape: f32[16,128], index: 4, kind: output, shape index: {1}]
  %s5 = inlined_call_operand.vmem [shape: f32[16,128], index: 5, kind: output, shape index: {2}]
  %s6 = inlined_call_operand.vmem [shape: f32[16,128], index: 6, kind: output, shape index: {3}]
  %7 = xla_tuple %s3, %s4, %s5, %s6
  %s8 = sld [smem:[#allocation0]]
  $region84: #{powerlaw_lstm_forward.1} parent=0
    _
  %s10 = ssub.s32 1, %s8
  %s11 = scalar_select 0, %s10, %s8
  loop: start=0, step=1, limit=4
  $region2: #{powerlaw_lstm_forward.1} parent=0 // loop_pre_header
    _
  $region3: #{powerlaw_lstm_forward.1} parent=0 // loop_header
    %s13 = sphi 0, %s17
    %p14 = scmp.ge.s32.totalorder %s13, 4
    %s23 = sphi 0, %s25
    %s26 = sphi 0, %s23
    %s27 = sphi 0, %s26
    %s43 = sphi 0, %s27
    %s47 = sphi 0, %s47
    %s49 = sphi 0, %s47
    %s50 = sphi 0, %s49
    %s64 = sphi 0, %s50
    %s68 = sphi 0, %s68
    %s70 = sphi 0, %s68
    %s71 = sphi 0, %s70
    %s85 = sphi 0, %s71
    %s91 = sphi 0, %s93
    %s94 = sphi 0, %s91
    %s95 = sphi 0, %s94
    %s111 = sphi 0, %s95
    %s115 = sphi 0, %s115
    %s117 = sphi 0, %s115
    %s118 = sphi 0, %s117
    %s132 = sphi 0, %s118
    %s136 = sphi 0, %s136
    %s138 = sphi 0, %s136
    %s139 = sphi 0, %s138
    %s153 = sphi 0, %s139
    %s157 = sphi 0, %s157
    %s159 = sphi 0, %s157
    %s160 = sphi 0, %s159
    %s174 = sphi 0, %s160
  $region4: #{powerlaw_lstm_forward.1} parent=0 // loop_header_branch
    %16 = sbr.rel (%p14) target = $region8
  $region5: #{powerlaw_lstm_forward.1} parent=0 // loop_body
    %s18 = ssub.s32 %s13, 1
    %s19 = ssub.s32 %s13, 2
    %s20 = sadd.s32 %s13, 1
    %s21 = ssub.s32 %s13, %s20
    %p22 = scmp.eq.s32.totalorder %s21, 0
    %s24 = sadd.s32 %s23, 1
    %s25 = scalar_select %p22, %s23, %s24
    %p28 = pneg %p22
    %p29 = scmp.eq.s32.totalorder %s13, 1
    %p30 = por %p28, %p29
    %p31 = scmp.ne.s32.totalorder %s23, %s26
    %p32 = scmp.eq.s32.totalorder %s13, 0
    %p33 = por %p31, %p32
    %p34 = scmp.ne.s32.totalorder %s23, %s26
    %p35 = scmp.eq.s32.totalorder %s18, 1
    %p36 = por %p34, %p35
    %p37 = scmp.ne.s32.totalorder %s26, %s27
    %p38 = scmp.eq.s32.totalorder %s18, 0
    %p39 = por %p37, %p38
    %p40 = scmp.ne.s32.totalorder %s26, %s27
    %p41 = scmp.eq.s32.totalorder %s19, 1
    %p42 = por %p40, %p41
    %p44 = scmp.ne.s32.totalorder %s27, %s43
    %p45 = scmp.eq.s32.totalorder %s19, 0
    %p46 = por %p44, %p45
    %s48 = sadd.s32 %s47, 1
    %p51 = scmp.eq.s32.totalorder %s13, 1
    %p52 = scmp.ne.s32.totalorder %s47, %s49
    %p53 = scmp.eq.s32.totalorder %s13, 0
    %p54 = por %p52, %p53
    %p55 = scmp.ne.s32.totalorder %s47, %s49
    %p56 = scmp.eq.s32.totalorder %s18, 1
    %p57 = por %p55, %p56
    %p58 = scmp.ne.s32.totalorder %s49, %s50
    %p59 = scmp.eq.s32.totalorder %s18, 0
    %p60 = por %p58, %p59
    %p61 = scmp.ne.s32.totalorder %s49, %s50
    %p62 = scmp.eq.s32.totalorder %s19, 1
    %p63 = por %p61, %p62
    %p65 = scmp.ne.s32.totalorder %s50, %s64
    %p66 = scmp.eq.s32.totalorder %s19, 0
    %p67 = por %p65, %p66
    %s69 = sadd.s32 %s68, 1
    %p72 = scmp.eq.s32.totalorder %s13, 1
    %p73 = scmp.ne.s32.totalorder %s68, %s70
    %p74 = scmp.eq.s32.totalorder %s13, 0
    %p75 = por %p73, %p74
    %p76 = scmp.ne.s32.totalorder %s68, %s70
    %p77 = scmp.eq.s32.totalorder %s18, 1
    %p78 = por %p76, %p77
    %p79 = scmp.ne.s32.totalorder %s70, %s71
    %p80 = scmp.eq.s32.totalorder %s18, 0
    %p81 = por %p79, %p80
    %p82 = scmp.ne.s32.totalorder %s70, %s71
    %p83 = scmp.eq.s32.totalorder %s19, 1
    %p84 = por %p82, %p83
    %p86 = scmp.ne.s32.totalorder %s71, %s85
    %p87 = scmp.eq.s32.totalorder %s19, 0
    %p88 = por %p86, %p87
    %s89 = ssub.s32 %s13, %s20
    %p90 = scmp.eq.s32.totalorder %s89, 0
    %s92 = sadd.s32 %s91, 1
    %s93 = scalar_select %p90, %s91, %s92
    %p96 = pneg %p90
    %p97 = scmp.eq.s32.totalorder %s13, 1
    %p98 = por %p96, %p97
    %p99 = scmp.ne.s32.totalorder %s91, %s94
    %p100 = scmp.eq.s32.totalorder %s13, 0
    %p101 = por %p99, %p100
    %p102 = scmp.ne.s32.totalorder %s91, %s94
    %p103 = scmp.eq.s32.totalorder %s18, 1
    %p104 = por %p102, %p103
    %p105 = scmp.ne.s32.totalorder %s94, %s95
    %p106 = scmp.eq.s32.totalorder %s18, 0
    %p107 = por %p105, %p106
    %p108 = scmp.ne.s32.totalorder %s94, %s95
    %p109 = scmp.eq.s32.totalorder %s19, 1
    %p110 = por %p108, %p109
    %p112 = scmp.ne.s32.totalorder %s95, %s111
    %p113 = scmp.eq.s32.totalorder %s19, 0
    %p114 = por %p112, %p113
    %s116 = sadd.s32 %s115, 1
    %p119 = scmp.eq.s32.totalorder %s13, 1
    %p120 = scmp.ne.s32.totalorder %s115, %s117
    %p121 = scmp.eq.s32.totalorder %s13, 0
    %p122 = por %p120, %p121
    %p123 = scmp.ne.s32.totalorder %s115, %s117
    %p124 = scmp.eq.s32.totalorder %s18, 1
    %p125 = por %p123, %p124
    %p126 = scmp.ne.s32.totalorder %s117, %s118
    %p127 = scmp.eq.s32.totalorder %s18, 0
    %p128 = por %p126, %p127
    %p129 = scmp.ne.s32.totalorder %s117, %s118
    %p130 = scmp.eq.s32.totalorder %s19, 1
    %p131 = por %p129, %p130
    %p133 = scmp.ne.s32.totalorder %s118, %s132
    %p134 = scmp.eq.s32.totalorder %s19, 0
    %p135 = por %p133, %p134
    %s137 = sadd.s32 %s136, 1
    %p140 = scmp.eq.s32.totalorder %s13, 1
    %p141 = scmp.ne.s32.totalorder %s136, %s138
    %p142 = scmp.eq.s32.totalorder %s13, 0
    %p143 = por %p141, %p142
    %p144 = scmp.ne.s32.totalorder %s136, %s138
    %p145 = scmp.eq.s32.totalorder %s18, 1
    %p146 = por %p144, %p145
    %p147 = scmp.ne.s32.totalorder %s138, %s139
    %p148 = scmp.eq.s32.totalorder %s18, 0
    %p149 = por %p147, %p148
    %p150 = scmp.ne.s32.totalorder %s138, %s139
    %p151 = scmp.eq.s32.totalorder %s19, 1
    %p152 = por %p150, %p151
    %p154 = scmp.ne.s32.totalorder %s139, %s153
    %p155 = scmp.eq.s32.totalorder %s19, 0
    %p156 = por %p154, %p155
    %s158 = sadd.s32 %s157, 1
    %p161 = scmp.eq.s32.totalorder %s13, 1
    %p162 = scmp.ne.s32.totalorder %s157, %s159
    %p163 = scmp.eq.s32.totalorder %s13, 0
    %p164 = por %p162, %p163
    %p165 = scmp.ne.s32.totalorder %s157, %s159
    %p166 = scmp.eq.s32.totalorder %s18, 1
    %p167 = por %p165, %p166
    %p168 = scmp.ne.s32.totalorder %s159, %s160
    %p169 = scmp.eq.s32.totalorder %s18, 0
    %p170 = por %p168, %p169
    %p171 = scmp.ne.s32.totalorder %s159, %s160
    %p172 = scmp.eq.s32.totalorder %s19, 1
    %p173 = por %p171, %p172
    %p175 = scmp.ne.s32.totalorder %s160, %s174
    %p176 = scmp.eq.s32.totalorder %s19, 0
    %p177 = por %p175, %p176
    %p178 = scmp.le.s32.totalorder 1, %s13
    %p179 = scmp.lt.s32.totalorder %s13, 3
    %p180 = pnand %p178, %p179
    %p181 = pneg %p180
    // Predicated region
    $region9: #{powerlaw_lstm_forward.1} parent=5 // pred_check
      _
    $region10: #{powerlaw_lstm_forward.1} parent=5 // pred_check_branch
      %183 = sbr.rel (%p180) target = $region12
    $region11: #{powerlaw_lstm_forward.1} parent=5 // pred_region
      %s184 = ssub.s32 %s13, 1
      // Predicated region
      $region13: #{powerlaw_lstm_forward.1} parent=11 // pred_check
        %p185 = pneg %p60
      $region14: #{powerlaw_lstm_forward.1} parent=11 // pred_check_branch
        %187 = sbr.rel (%p185) target = $region16
      $region15: #{powerlaw_lstm_forward.1} parent=11 // pred_region
        _
      $region16: #{powerlaw_lstm_forward.1} parent=11 // pred_fallthru
        _
      // Predicated region
      $region17: #{powerlaw_lstm_forward.1} parent=11 // pred_check
        %p188 = pneg %p81
      $region18: #{powerlaw_lstm_forward.1} parent=11 // pred_check_branch
        %190 = sbr.rel (%p188) target = $region20
      $region19: #{powerlaw_lstm_forward.1} parent=11 // pred_region
        _
      $region20: #{powerlaw_lstm_forward.1} parent=11 // pred_fallthru
        _
    $region12: #{powerlaw_lstm_forward.1} parent=5 // pred_fallthru
      _
    %p191 = scmp.lt.s32.totalorder %s13, 2
    // Predicated region
    $region21: #{powerlaw_lstm_forward.1} parent=5 // pred_check
      %p192 = pneg %p191
    $region22: #{powerlaw_lstm_forward.1} parent=5 // pred_check_branch
      %194 = sbr.rel (%p192) target = $region24
    $region23: #{powerlaw_lstm_forward.1} parent=5 // pred_region
      // Predicated region
      $region25: #{powerlaw_lstm_forward.1} parent=23 // pred_check
        %p195 = pneg %p33
      $region26: #{powerlaw_lstm_forward.1} parent=23 // pred_check_branch
        %197 = sbr.rel (%p195) target = $region28
      $region27: #{powerlaw_lstm_forward.1} parent=23 // pred_region
        %s198 = smul.u32 4, %s13
        %p199 = scmp.lt.s32.totalorder %s198, 7
        %s200 = scalar_select %p199, %s198, 7
        %s201 = smul.addr %s200, 6
        %s202 = smul.addr %s201, 4
        %s203 = scalar_lea.vmem %s0, %s202
        %s204 = smul.u32 4, %s13
      $region28: #{powerlaw_lstm_forward.1} parent=23 // pred_fallthru
        _
    $region24: #{powerlaw_lstm_forward.1} parent=5 // pred_fallthru
      _
    %p205 = scmp.le.s32.totalorder 1, %s13
    %p206 = scmp.lt.s32.totalorder %s13, 3
    %p207 = pnand %p205, %p206
    %p208 = pneg %p207
    // Predicated region
    $region29: #{powerlaw_lstm_forward.1} parent=5 // pred_check
      _
    $region30: #{powerlaw_lstm_forward.1} parent=5 // pred_check_branch
      %210 = sbr.rel (%p207) target = $region32
    $region31: #{powerlaw_lstm_forward.1} parent=5 // pred_region
      %s211 = ssub.s32 %s13, 1
      %s212 = smul.u32 4, %s18
      %p213 = scmp.lt.s32.totalorder %s212, 7
      %s214 = scalar_select %p213, %s212, 7
      %s215 = smul.addr %s214, 6
      %s216 = smul.addr %s215, 4
      %s217 = scalar_lea.vmem %s0, %s216
      %p218 = pneg %p39
      %p219 = pneg %p36
      %p220 = pneg %p60
      %p221 = pneg %p57
      %p222 = pneg %p81
      %p223 = pneg %p78
      %p224 = pneg %p107
      %p225 = pneg %p104
      %s226 = smul.u32 4, %s18
      %p227 = scmp.lt.s32.totalorder %s226, 7
      %s228 = scalar_select %p227, %s226, 7
      %s229 = smul.addr %s228, 2
      %s230 = smul.addr %s229, 4
      %s231 = scalar_lea.vmem %s3, %s230
      %p232 = pneg %p128
      %p233 = pneg %p125
      %p234 = pneg %p149
      %p235 = pneg %p146
      %p236 = pneg %p170
      %p237 = pneg %p167
      %s238 = smul.u32 4, %s18
      %p239 = scmp.lt.s32.totalorder %s238, 7
      %s240 = scalar_select %p239, %s238, 7
      %s241 = smul.addr %s240, 6
      %s242 = smul.addr %s241, 4
      %s243 = scalar_lea.vmem %s0, %s242
      %s244 = smul.u32 4, %s18
      %s245 = smul.u32 4, %s18
      %p246 = scmp.lt.s32.totalorder %s245, 7
      %s247 = scalar_select %p246, %s245, 7
      %s248 = smul.addr %s247, 2
      %s249 = smul.addr %s248, 4
      %s250 = scalar_lea.vmem %s3, %s249
      %s251 = smul.u32 4, %s18
      %p252 = scmp.eq.s32.totalorder %s18, 0
      // Predicated region
      $region33: #{powerlaw_lstm_forward.1} parent=31 // pred_check
        %p253 = pneg %p252
      $region34: #{powerlaw_lstm_forward.1} parent=31 // pred_check_branch
        %255 = sbr.rel (%p253) target = $region36
      $region35: #{powerlaw_lstm_forward.1} parent=31 // pred_region
        %256 = vst [vmem:[#allocation2] sm:$0xff] 0.0
        %257 = vst [vmem:[#allocation2 + $0x8] sm:$0xff] 0.0
        %258 = vst [vmem:[#allocation3] sm:$0xff] 0.0
        %259 = vst [vmem:[#allocation3 + $0x8] sm:$0xff] 0.0
        %260 = vst [vmem:[#allocation4] sm:$0xff] -1.0
        %261 = vst [vmem:[#allocation4 + $0x8] sm:$0xff] -1.0
      $region36: #{powerlaw_lstm_forward.1} parent=31 // pred_fallthru
        _
      %v262 = vld [vmem:[%s1] sm:$0xff]
      %v263 = vld [vmem:[%s1 + $0x8] sm:$0xf]
      %v264 = vld [vmem:[%s1 + $0xc] sm:$0xff]
      %v265 = vld [vmem:[%s1 + $0x14] sm:$0xf]
      %v266 = vld [vmem:[%s1 + $0x18] sm:$0xff]
      %v267 = vld [vmem:[%s1 + $0x20] sm:$0xf]
      %v268 = vld [vmem:[%s1 + $0x24] sm:$0xff]
      %v269 = vld [vmem:[%s1 + $0x2c] sm:$0xf]
      %v270 = vld [vmem:[%s1 + $0x30] sm:$0xff]
      %v271 = vld [vmem:[%s1 + $0x38] sm:$0xf]
      %v272 = vld [vmem:[%s1 + $0x3c] sm:$0xff]
      %v273 = vld [vmem:[%s1 + $0x44] sm:$0xf]
      %v274 = vld [vmem:[%s1 + $0x48] sm:$0xff]
      %v275 = vld [vmem:[%s1 + $0x50] sm:$0xf]
      %v276 = vld [vmem:[%s1 + $0x54] sm:$0xff]
      %v277 = vld [vmem:[%s1 + $0x5c] sm:$0xf]
      %v278 = vld [vmem:[%s1 + $0x60] sm:$0xff]
      %v279 = vld [vmem:[%s1 + $0x68] sm:$0xf]
      %v280 = vld [vmem:[%s1 + $0x6c] sm:$0xff]
      %v281 = vld [vmem:[%s1 + $0x74] sm:$0xf]
      %v282 = vld [vmem:[%s1 + $0x78] sm:$0xff]
      %v283 = vld [vmem:[%s1 + $0x80] sm:$0xf]
      %v284 = vld [vmem:[%s1 + $0x84] sm:$0xff]
      %v285 = vld [vmem:[%s1 + $0x8c] sm:$0xf]
      %v286 = vld [vmem:[%s1 + $0x90] sm:$0xff]
      %v287 = vld [vmem:[%s1 + $0x98] sm:$0xf]
      %v288 = vld [vmem:[%s1 + $0x9c] sm:$0xff]
      %v289 = vld [vmem:[%s1 + $0xa4] sm:$0xf]
      %v290 = vld [vmem:[%s1 + $0xa8] sm:$0xff]
      %v291 = vld [vmem:[%s1 + $0xb0] sm:$0xf]
      %v292 = vld [vmem:[%s1 + $0xb4] sm:$0xff]
      %v293 = vld [vmem:[%s1 + $0xbc] sm:$0xf]
      %v294 = vld [vmem:[%s2] sm:$0x1]
      %s295 = smul.u32 %s18, 4
      %s296 = scvt.s32.f32 %s295
      %v297 = vld [vmem:[#allocation2] sm:$0xff]
      %v298 = vld [vmem:[#allocation2 + $0x8] sm:$0xff]
      %v299 = vld [vmem:[#allocation3] sm:$0xff]
      %v300 = vld [vmem:[#allocation3 + $0x8] sm:$0xff]
      %v301 = vld [vmem:[#allocation4] sm:$0xff]
      %v302 = vld [vmem:[#allocation4 + $0x8] sm:$0xff]
      loop: start=0, step=1, limit=4
      $region37: #{powerlaw_lstm_forward.1} parent=31 // loop_pre_header
        _
      $region38: #{powerlaw_lstm_forward.1} parent=31 // loop_header
        %s304 = sphi 0, %s308
        %p305 = scmp.ge.s32.totalorder %s304, 4
        %v309 = vphi %v297, %v655
        %v310 = vphi %v298, %v656
        %v311 = vphi %v299, %v651
        %v312 = vphi %v300, %v652
        %v313 = vphi %v301, %v593
        %v314 = vphi %v302, %v594
      $region39: #{powerlaw_lstm_forward.1} parent=31 // loop_header_branch
        %307 = sbr.rel (%p305) target = $region43
      $region40: #{powerlaw_lstm_forward.1} parent=31 // loop_body
        %s315 = smul.u32 %s304, 6
        %s316 = smul.addr %s315, 4
        %s317 = scalar_lea.vmem %s243, %s316
        %v318 = vld [vmem:[%s317] sm:$0xff]
        %v319 = vld [vmem:[%s317 + $0x8] sm:$0xf]
        %v320 = vld [vmem:[%s317 + $0xc] sm:$0xff]
        %v321 = vld [vmem:[%s317 + $0x14] sm:$0xf]
        %v322 = vunpack.c.l.bf16 %v318
        %v323 = vunpack.c.h.bf16 %v318
        %v324 = vunpack.c.l.bf16 %v319
        %v325 = vunpack.c.l.bf16 %v320
        %v326 = vunpack.c.h.bf16 %v320
        %v327 = vunpack.c.l.bf16 %v321
        %v328 = vpack.c.bf16 %v310, %v309
        %v361 = vunpack.c.l.b16 %v262
        %v362 = vunpack.c.h.b16 %v262
        %v363 = vunpack.c.l.b16 %v263
        %v364 = vunpack.c.l.b16 %v264
        %v365 = vunpack.c.h.b16 %v264
        %v366 = vunpack.c.l.b16 %v265
        %v367 = vunpack.c.l.b16 %v266
        %v368 = vunpack.c.h.b16 %v266
        %v369 = vunpack.c.l.b16 %v267
        %v370 = vunpack.c.l.b16 %v268
        %v371 = vunpack.c.h.b16 %v268
        %v372 = vunpack.c.l.b16 %v269
        %v373 = vunpack.c.l.b16 %v270
        %v374 = vunpack.c.h.b16 %v270
        %v375 = vunpack.c.l.b16 %v271
        %v376 = vunpack.c.l.b16 %v272
        %v377 = vunpack.c.h.b16 %v272
        %v378 = vunpack.c.l.b16 %v273
        %v379 = vunpack.c.l.b16 %v274
        %v380 = vunpack.c.h.b16 %v274
        %v381 = vunpack.c.l.b16 %v275
        %v382 = vunpack.c.l.b16 %v276
        %v383 = vunpack.c.h.b16 %v276
        %v384 = vunpack.c.l.b16 %v277
        %v385 = vunpack.c.l.b16 %v278
        %v386 = vunpack.c.h.b16 %v278
        %v387 = vunpack.c.l.b16 %v279
        %v388 = vunpack.c.l.b16 %v280
        %v389 = vunpack.c.h.b16 %v280
        %v390 = vunpack.c.l.b16 %v281
        %v391 = vunpack.c.l.b16 %v282
        %v392 = vunpack.c.h.b16 %v282
        %v393 = vunpack.c.l.b16 %v283
        %v394 = vunpack.c.l.b16 %v284
        %v395 = vunpack.c.h.b16 %v284
        %v396 = vunpack.c.l.b16 %v285
        %v397 = vunpack.c.l.b16 %v286
        %v398 = vunpack.c.h.b16 %v286
        %v399 = vunpack.c.l.b16 %v287
        %v400 = vunpack.c.l.b16 %v288
        %v401 = vunpack.c.h.b16 %v288
        %v402 = vunpack.c.l.b16 %v289
        %v403 = vunpack.c.l.b16 %v290
        %v404 = vunpack.c.h.b16 %v290
        %v405 = vunpack.c.l.b16 %v291
        %v406 = vunpack.c.l.b16 %v292
        %v407 = vunpack.c.h.b16 %v292
        %v408 = vunpack.c.l.b16 %v293
        %v409 = vpack.c.b16 %v364, %v361
        %v410 = vpack.c.b16 %v365, %v362
        %v411 = vpack.c.b16 %v366, %v363
        %v412 = vpack.c.b16 %v370, %v367
        %v413 = vpack.c.b16 %v371, %v368
        %v414 = vpack.c.b16 %v372, %v369
        %v415 = vpack.c.b16 %v376, %v373
        %v416 = vpack.c.b16 %v377, %v374
        %v417 = vpack.c.b16 %v378, %v375
        %v418 = vpack.c.b16 %v382, %v379
        %v419 = vpack.c.b16 %v383, %v380
        %v420 = vpack.c.b16 %v384, %v381
        %v421 = vpack.c.b16 %v388, %v385
        %v422 = vpack.c.b16 %v389, %v386
        %v423 = vpack.c.b16 %v390, %v387
        %v424 = vpack.c.b16 %v394, %v391
        %v425 = vpack.c.b16 %v395, %v392
        %v426 = vpack.c.b16 %v396, %v393
        %v427 = vpack.c.b16 %v400, %v397
        %v428 = vpack.c.b16 %v401, %v398
        %v429 = vpack.c.b16 %v402, %v399
        %v430 = vpack.c.b16 %v406, %v403
        %v431 = vpack.c.b16 %v407, %v404
        %v432 = vpack.c.b16 %v408, %v405
        %457 = vmatpush.bf16.msra.mxu0 %v430
        %458 = vmatpush.bf16.msra.mxu0 %v427
        %459 = vmatpush.bf16.msra.mxu0 %v424
        %460 = vmatpush.bf16.msra.mxu0 %v421
        %461 = vmatpush.bf16.msra.mxu0 %v418
        %462 = vmatpush.bf16.msra.mxu0 %v415
        %463 = vmatpush.bf16.msra.mxu0 %v412
        %464 = vmatpush.bf16.msra.mxu0 %v409
        %465 = vmatmul.bf16.gmra.mxu0 %v328
        %v466 = vpop.f32.mrf.mxu0
        %v467 = vadd.f32 0.0, %v466
        %v468 = vpop.f32.mrf.mxu0
        %v469 = vadd.f32 0.0, %v468
        %470 = vdwg.mxu0
        %471 = vmatpush.bf16.msra.mxu0 %v431
        %472 = vmatpush.bf16.msra.mxu0 %v428
        %473 = vmatpush.bf16.msra.mxu0 %v425
        %474 = vmatpush.bf16.msra.mxu0 %v422
        %475 = vmatpush.bf16.msra.mxu0 %v419
        %476 = vmatpush.bf16.msra.mxu0 %v416
        %477 = vmatpush.bf16.msra.mxu0 %v413
        %478 = vmatpush.bf16.msra.mxu0 %v410
        %479 = vmatmul.bf16.gmra.mxu0 %v328
        %v480 = vpop.f32.mrf.mxu0
        %v481 = vadd.f32 0.0, %v480
        %v482 = vpop.f32.mrf.mxu0
        %v483 = vadd.f32 0.0, %v482
        %484 = vdwg.mxu0
        %485 = vmatpush.bf16.msra.mxu0 %v432
        %486 = vmatpush.bf16.msra.mxu0 %v429
        %487 = vmatpush.bf16.msra.mxu0 %v426
        %488 = vmatpush.bf16.msra.mxu0 %v423
        %489 = vmatpush.bf16.msra.mxu0 %v420
        %490 = vmatpush.bf16.msra.mxu0 %v417
        %491 = vmatpush.bf16.msra.mxu0 %v414
        %492 = vmatpush.bf16.msra.mxu0 %v411
        %493 = vmatmul.bf16.gmra.mxu0 %v328
        %v494 = vpop.f32.mrf.mxu0
        %v495 = vadd.f32 0.0, %v494
        %v496 = vpop.f32.mrf.mxu0
        %v497 = vadd.f32 0.0, %v496
        %498 = vdwg.mxu0
        %v499 = vadd.f32 %v322, %v467
        %v500 = vadd.f32 %v323, %v481
        %v501 = vadd.f32 %v324, %v495
        %v502 = vadd.f32 %v325, %v469
        %v503 = vadd.f32 %v326, %v483
        %v504 = vadd.f32 %v327, %v497
        %v505 = vxor.u32 %v499, 2147483648
        %v506 = vxor.u32 %v500, 2147483648
        %v507 = vxor.u32 %v502, 2147483648
        %v508 = vxor.u32 %v503, 2147483648
        %v509 = vmul.f32 %v505, 1.442695
        %v510 = vpow.pop %v509
        %v511 = vmul.f32 %v506, 1.442695
        %v512 = vpow.pop %v511
        %v513 = vmul.f32 %v507, 1.442695
        %v514 = vpow.pop %v513
        %v515 = vmul.f32 %v508, 1.442695
        %v516 = vpow.pop %v515
        %v517 = vadd.f32 %v510, 1.0
        %v518 = vadd.f32 %v512, 1.0
        %v519 = vadd.f32 %v514, 1.0
        %v520 = vadd.f32 %v516, 1.0
        %v521 = vrcp.pop %v517
        %v522 = vmul.f32 %v517, %v521
        %v523 = vsub.f32 1.0, %v522
        %v524 = vmul.f32 %v521, %v523
        %v525 = vadd.f32 %v521, %v524
        %vm526 = vweird.f32 %v517
        %vm527 = vweird.f32 %v521
        %vm528 = vmor %vm526, %vm527
        %v529 = vsel %vm528, %v521, %v525
        %v530 = vand.u32 2147483647, %v517
        %vm531 = vcmp.eq.f32.partialorder %v530, 8.507059e+37
        %v532 = vand.u32 %v517, 2147483648
        %v533 = vor.u32 1.1754944e-38, %v532
        %v534 = vsel %vm531, %v533, %v529
        %v535 = vmul.f32 1.0, %v534
        %v536 = vrcp.pop %v518
        %v537 = vmul.f32 %v518, %v536
        %v538 = vsub.f32 1.0, %v537
        %v539 = vmul.f32 %v536, %v538
        %v540 = vadd.f32 %v536, %v539
        %vm541 = vweird.f32 %v518
        %vm542 = vweird.f32 %v536
        %vm543 = vmor %vm541, %vm542
        %v544 = vsel %vm543, %v536, %v540
        %v545 = vand.u32 2147483647, %v518
        %vm546 = vcmp.eq.f32.partialorder %v545, 8.507059e+37
        %v547 = vand.u32 %v518, 2147483648
        %v548 = vor.u32 1.1754944e-38, %v547
        %v549 = vsel %vm546, %v548, %v544
        %v550 = vmul.f32 1.0, %v549
        %v551 = vrcp.pop %v519
        %v552 = vmul.f32 %v519, %v551
        %v553 = vsub.f32 1.0, %v552
        %v554 = vmul.f32 %v551, %v553
        %v555 = vadd.f32 %v551, %v554
        %vm556 = vweird.f32 %v519
        %vm557 = vweird.f32 %v551
        %vm558 = vmor %vm556, %vm557
        %v559 = vsel %vm558, %v551, %v555
        %v560 = vand.u32 2147483647, %v519
        %vm561 = vcmp.eq.f32.partialorder %v560, 8.507059e+37
        %v562 = vand.u32 %v519, 2147483648
        %v563 = vor.u32 1.1754944e-38, %v562
        %v564 = vsel %vm561, %v563, %v559
        %v565 = vmul.f32 1.0, %v564
        %v566 = vrcp.pop %v520
        %v567 = vmul.f32 %v520, %v566
        %v568 = vsub.f32 1.0, %v567
        %v569 = vmul.f32 %v566, %v568
        %v570 = vadd.f32 %v566, %v569
        %vm571 = vweird.f32 %v520
        %vm572 = vweird.f32 %v566
        %vm573 = vmor %vm571, %vm572
        %v574 = vsel %vm573, %v566, %v570
        %v575 = vand.u32 2147483647, %v520
        %vm576 = vcmp.eq.f32.partialorder %v575, 8.507059e+37
        %v577 = vand.u32 %v520, 2147483648
        %v578 = vor.u32 1.1754944e-38, %v577
        %v579 = vsel %vm576, %v578, %v574
        %v580 = vmul.f32 1.0, %v579
        %v581 = vtanh.pop %v501
        %v582 = vtanh.pop %v504
        %s583 = scvt.s32.f32 %s304
        %s584 = sadd.f32 %s296, %s583
        %s585 = ssub.f32 %s584, 0.001
        %v586 = vstv %s585
        %v587 = vmul.f32 %v535, %v586
        %v588 = vmul.f32 %v565, %v586
        %v589 = vsub.f32 1.0, %v535
        %v590 = vsub.f32 1.0, %v565
        %v591 = vmul.f32 %v589, %v313
        %v592 = vmul.f32 %v590, %v314
        %v593 = vadd.f32 %v587, %v591
        %v594 = vadd.f32 %v588, %v592
        %v595 = vstv %s584
        %v596 = vsub.f32 %v595, %v593
        %v597 = vsub.f32 %v595, %v594
        %v598 = vadd.f32 %v596, 0.001
        %v599 = vadd.f32 %v597, 0.001
        %v600 = vadd.f32 %v596, 1.0
        %v601 = vadd.f32 %v597, 1.0
        %v602 = vrcp.pop %v600
        %v603 = vmul.f32 %v600, %v602
        %v604 = vsub.f32 1.0, %v603
        %v605 = vmul.f32 %v602, %v604
        %v606 = vadd.f32 %v602, %v605
        %vm607 = vweird.f32 %v600
        %vm608 = vweird.f32 %v602
        %vm609 = vmor %vm607, %vm608
        %v610 = vsel %vm609, %v602, %v606
        %v611 = vand.u32 2147483647, %v600
        %vm612 = vcmp.eq.f32.partialorder %v611, 8.507059e+37
        %v613 = vand.u32 %v600, 2147483648
        %v614 = vor.u32 1.1754944e-38, %v613
        %v615 = vsel %vm612, %v614, %v610
        %v616 = vmul.f32 %v598, %v615
        %v617 = vrcp.pop %v601
        %v618 = vmul.f32 %v601, %v617
        %v619 = vsub.f32 1.0, %v618
        %v620 = vmul.f32 %v617, %v619
        %v621 = vadd.f32 %v617, %v620
        %vm622 = vweird.f32 %v601
        %vm623 = vweird.f32 %v617
        %vm624 = vmor %vm622, %vm623
        %v625 = vsel %vm624, %v617, %v621
        %v626 = vand.u32 2147483647, %v601
        %vm627 = vcmp.eq.f32.partialorder %v626, 8.507059e+37
        %v628 = vand.u32 %v601, 2147483648
        %v629 = vor.u32 1.1754944e-38, %v628
        %v630 = vsel %vm627, %v629, %v625
        %v631 = vmul.f32 %v599, %v630
        %v632 = vlog2.pop %v616
        %v633 = vmul.f32 %v632, 0.6931472
        %v634 = vlog2.pop %v631
        %v635 = vmul.f32 %v634, 0.6931472
        %v637 = vperm.slane %v294, 0
        %v639 = vmul.f32 %v637, %v633
        %v640 = vmul.f32 %v637, %v635
        %v641 = vmul.f32 %v639, 1.442695
        %v642 = vpow.pop %v641
        %v643 = vmul.f32 %v640, 1.442695
        %v644 = vpow.pop %v643
        %v645 = vmul.f32 %v642, %v311
        %v646 = vmul.f32 %v644, %v312
        %v647 = vsub.f32 1.0, %v642
        %v648 = vsub.f32 1.0, %v644
        %v649 = vmul.f32 %v647, %v581
        %v650 = vmul.f32 %v648, %v582
        %v651 = vadd.f32 %v645, %v649
        %v652 = vadd.f32 %v646, %v650
        %v653 = vtanh.pop %v651
        %v654 = vtanh.pop %v652
        %v655 = vmul.f32 %v550, %v653
        %v656 = vmul.f32 %v580, %v654
        %v657 = vpack.c.bf16 %v655, %v655
        %v658 = vpack.c.bf16 %v656, %v656
        %s659 = smul.u32 %s304, 2
        %s660 = smul.addr %s659, 4
        %s661 = scalar_lea.vmem %s250, %s660
        %662 = vst [vmem:[%s661] sm:$0xf] %v657
        %663 = vst [vmem:[%s661 + $0x4] sm:$0xf] %v658
      $region41: #{powerlaw_lstm_forward.1} parent=31 // loop_footer
        %s308 = sadd.s32 1, %s304
      $region42: #{powerlaw_lstm_forward.1} parent=31 // loop_footer_branch
        %303 = sbr.rel target = $region38
      $region43: #{powerlaw_lstm_forward.1} parent=31 // loop_exit
        _
      %664 = vst [vmem:[#allocation2] sm:$0xff] %v309
      %665 = vst [vmem:[#allocation2 + $0x8] sm:$0xff] %v310
      %666 = vst [vmem:[#allocation3] sm:$0xff] %v311
      %667 = vst [vmem:[#allocation3 + $0x8] sm:$0xff] %v312
      %668 = vst [vmem:[#allocation4] sm:$0xff] %v313
      %669 = vst [vmem:[#allocation4 + $0x8] sm:$0xff] %v314
      %p670 = scmp.eq.s32.totalorder %s18, 1
      // Predicated region
      $region44: #{powerlaw_lstm_forward.1} parent=31 // pred_check
        %p671 = pneg %p670
      $region45: #{powerlaw_lstm_forward.1} parent=31 // pred_check_branch
        %673 = sbr.rel (%p671) target = $region47
      $region46: #{powerlaw_lstm_forward.1} parent=31 // pred_region
        %674 = vst [vmem:[%s4] sm:$0xff] %v309
        %675 = vst [vmem:[%s4 + $0x8] sm:$0xff] %v310
        %676 = vst [vmem:[%s5] sm:$0xff] %v311
        %677 = vst [vmem:[%s5 + $0x8] sm:$0xff] %v312
        %678 = vst [vmem:[%s6] sm:$0xff] %v313
        %679 = vst [vmem:[%s6 + $0x8] sm:$0xff] %v314
      $region47: #{powerlaw_lstm_forward.1} parent=31 // pred_fallthru
        _
      %s680 = smul.u32 4, %s18
      %p681 = scmp.lt.s32.totalorder %s680, 7
      %s682 = scalar_select %p681, %s680, 7
      %s683 = smul.addr %s682, 2
      %s684 = smul.addr %s683, 4
      %s685 = scalar_lea.vmem %s3, %s684
      // Predicated region
      $region48: #{powerlaw_lstm_forward.1} parent=31 // pred_check
        %p686 = pneg %p104
      $region49: #{powerlaw_lstm_forward.1} parent=31 // pred_check_branch
        %688 = sbr.rel (%p686) target = $region51
      $region50: #{powerlaw_lstm_forward.1} parent=31 // pred_region
        %s689 = smul.u32 4, %s18
      $region51: #{powerlaw_lstm_forward.1} parent=31 // pred_fallthru
        _
      // Predicated region
      $region52: #{powerlaw_lstm_forward.1} parent=31 // pred_check
        %p690 = pneg %p125
      $region53: #{powerlaw_lstm_forward.1} parent=31 // pred_check_branch
        %692 = sbr.rel (%p690) target = $region55
      $region54: #{powerlaw_lstm_forward.1} parent=31 // pred_region
        _
      $region55: #{powerlaw_lstm_forward.1} parent=31 // pred_fallthru
        _
      // Predicated region
      $region56: #{powerlaw_lstm_forward.1} parent=31 // pred_check
        %p693 = pneg %p146
      $region57: #{powerlaw_lstm_forward.1} parent=31 // pred_check_branch
        %695 = sbr.rel (%p693) target = $region59
      $region58: #{powerlaw_lstm_forward.1} parent=31 // pred_region
        _
      $region59: #{powerlaw_lstm_forward.1} parent=31 // pred_fallthru
        _
      // Predicated region
      $region60: #{powerlaw_lstm_forward.1} parent=31 // pred_check
        %p696 = pneg %p167
      $region61: #{powerlaw_lstm_forward.1} parent=31 // pred_check_branch
        %698 = sbr.rel (%p696) target = $region63
      $region62: #{powerlaw_lstm_forward.1} parent=31 // pred_region
        _
      $region63: #{powerlaw_lstm_forward.1} parent=31 // pred_fallthru
        _
      // Predicated region
      $region64: #{powerlaw_lstm_forward.1} parent=31 // pred_check
        %p699 = pneg %p125
      $region65: #{powerlaw_lstm_forward.1} parent=31 // pred_check_branch
        %701 = sbr.rel (%p699) target = $region67
      $region66: #{powerlaw_lstm_forward.1} parent=31 // pred_region
        _
      $region67: #{powerlaw_lstm_forward.1} parent=31 // pred_fallthru
        _
      // Predicated region
      $region68: #{powerlaw_lstm_forward.1} parent=31 // pred_check
        %p702 = pneg %p146
      $region69: #{powerlaw_lstm_forward.1} parent=31 // pred_check_branch
        %704 = sbr.rel (%p702) target = $region71
      $region70: #{powerlaw_lstm_forward.1} parent=31 // pred_region
        _
      $region71: #{powerlaw_lstm_forward.1} parent=31 // pred_fallthru
        _
      // Predicated region
      $region72: #{powerlaw_lstm_forward.1} parent=31 // pred_check
        %p705 = pneg %p167
      $region73: #{powerlaw_lstm_forward.1} parent=31 // pred_check_branch
        %707 = sbr.rel (%p705) target = $region75
      $region74: #{powerlaw_lstm_forward.1} parent=31 // pred_region
        _
      $region75: #{powerlaw_lstm_forward.1} parent=31 // pred_fallthru
        _
    $region32: #{powerlaw_lstm_forward.1} parent=5 // pred_fallthru
      _
    %p708 = scmp.le.s32.totalorder 2, %s13
    // Predicated region
    $region76: #{powerlaw_lstm_forward.1} parent=5 // pred_check
      %p709 = pneg %p708
    $region77: #{powerlaw_lstm_forward.1} parent=5 // pred_check_branch
      %711 = sbr.rel (%p709) target = $region79
    $region78: #{powerlaw_lstm_forward.1} parent=5 // pred_region
      %s712 = ssub.s32 %s13, 2
      // Predicated region
      $region80: #{powerlaw_lstm_forward.1} parent=78 // pred_check
        %p713 = pneg %p110
      $region81: #{powerlaw_lstm_forward.1} parent=78 // pred_check_branch
        %715 = sbr.rel (%p713) target = $region83
      $region82: #{powerlaw_lstm_forward.1} parent=78 // pred_region
        %s716 = smul.u32 4, %s19
        %p717 = scmp.lt.s32.totalorder %s716, 7
        %s718 = scalar_select %p717, %s716, 7
        %s719 = smul.addr %s718, 2
        %s720 = smul.addr %s719, 4
        %s721 = scalar_lea.vmem %s3, %s720
      $region83: #{powerlaw_lstm_forward.1} parent=78 // pred_fallthru
        _
    $region79: #{powerlaw_lstm_forward.1} parent=5 // pred_fallthru
      _
  $region6: #{powerlaw_lstm_forward.1} parent=0 // loop_footer
    %s17 = sadd.s32 1, %s13
  $region7: #{powerlaw_lstm_forward.1} parent=0 // loop_footer_branch
    %12 = sbr.rel target = $region3
  $region8: #{powerlaw_lstm_forward.1} parent=0 // loop_exit
    _

</llo_original>
